<compile_context>
chip_gen: v6e
topology: v6e:2x2x1
jax: 0.10.0
libtpu: 0.0.40
codegen_flags: <defaults>
</compile_context>

<pallas_src>
import functools

import jax
import jax.numpy as jnp
from jax.experimental import pallas as pl
from jax.experimental.pallas import tpu as pltpu


def _pick_tile_l(L, C, itemsize, vmem_budget_bytes=1 << 20):
    """Largest multiple-of-128 divisor of L with C*TL*itemsize <= budget.
    Falls back to full L when L is not 128-aligned (full-dim blocks are legal)."""
    if L % 128 != 0:
        return L
    max_tl = max(128, (vmem_budget_bytes // max(1, C * itemsize)) // 128 * 128)
    tl = min(L, max_tl)
    tl = (tl // 128) * 128
    while L % tl != 0:
        tl -= 128
    return tl


def _pool_mlp_kernel(x_ref, w1_ref, b1_ref, w2_ref, b2_ref, y_ref, acc_ref,
                     *, inv_l):
    l = pl.program_id(1)

    @pl.when(l == 0)
    def _():
        acc_ref[...] = jnp.zeros_like(acc_ref)

    # x_ref: (1, C, TL) -> per-channel partial sums (1, C), f32 accumulation.
    acc_ref[...] += jnp.sum(x_ref[...].astype(jnp.float32), axis=2)

    @pl.when(l == pl.num_programs(1) - 1)
    def _():
        mean = acc_ref[...] * inv_l                                  # (1, C)
        h = jnp.dot(mean, w1_ref[...],
                    preferred_element_type=jnp.float32) + b1_ref[...]
        h = jnp.maximum(h, 0.0)                                      # (1, Cmid)
        z = jnp.dot(h, w2_ref[...],
                    preferred_element_type=jnp.float32) + b2_ref[...]
        sig = 1.0 / (1.0 + jnp.exp(-z))                              # (1, C)
        y_ref[...] = sig[None].astype(y_ref.dtype)                   # (1, 1, C)


def _scale_kernel(x_ref, s_ref, o_ref):
    # x_ref: (1, C, TL), s_ref: (1, C, 1) -> broadcast over lanes (lane-dense vst).
    o_ref[...] = x_ref[...] * s_ref[...].astype(x_ref.dtype)


def channel_attention(x, w1, b1, w2, b2):
    """RCAN ChannelAttention forward.

    x : (B, C, H, W) NCHW feature map
    w1: (Cmid, C)   squeeze 1x1-conv weight (torch conv1.weight[..., 0, 0])
    b1: (Cmid,)
    w2: (C, Cmid)   excite 1x1-conv weight (torch conv2.weight[..., 0, 0])
    b2: (C,)
    returns (B, C, H, W) = x * sigmoid(W2 relu(W1 gap(x) + b1) + b2)
    """
    B, C, H, W = x.shape
    Cmid = w1.shape[0]
    L = H * W
    x3 = x.reshape(B, C, L)

    tl = _pick_tile_l(L, C, x.dtype.itemsize)
    n_l = L // tl

    # Lane-dense weight layouts for in-kernel (1,C)@(C,Cmid) / (1,Cmid)@(Cmid,C).
    w1_t = jnp.asarray(w1).T.astype(jnp.float32)               # (C, Cmid)
    w2_t = jnp.asarray(w2).T.astype(jnp.float32)               # (Cmid, C)
    b1_r = jnp.asarray(b1).reshape(1, Cmid).astype(jnp.float32)
    b2_r = jnp.asarray(b2).reshape(1, C).astype(jnp.float32)

    # ---- kernel 1: global average pool + 2-layer MLP + sigmoid -> (B, 1, C)
    y = pl.pallas_call(
        functools.partial(_pool_mlp_kernel, inv_l=1.0 / L),
        out_shape=jax.ShapeDtypeStruct((B, 1, C), jnp.float32),
        grid_spec=pltpu.PrefetchScalarGridSpec(
            num_scalar_prefetch=0,
            grid=(B, n_l),
            in_specs=[
                pl.BlockSpec((1, C, tl), lambda b, l: (b, 0, l)),
                pl.BlockSpec((C, Cmid), lambda b, l: (0, 0)),
                pl.BlockSpec((1, Cmid), lambda b, l: (0, 0)),
                pl.BlockSpec((Cmid, C), lambda b, l: (0, 0)),
                pl.BlockSpec((1, C), lambda b, l: (0, 0)),
            ],
            out_specs=pl.BlockSpec((1, 1, C), lambda b, l: (b, 0, 0)),
            scratch_shapes=[pltpu.VMEM((1, C), jnp.float32)],
        ),
        compiler_params=pltpu.CompilerParams(
            dimension_semantics=("parallel", "arbitrary")),
    )(x3, w1_t, b1_r, w2_t, b2_r)

    # (B, 1, C) -> (B, C, 1): tiny relayout on B*C scalars, done in plain JAX.
    scale = y.reshape(B, C, 1)

    # ---- kernel 2: broadcast per-channel scale over spatial, lane-dense tiles
    out3 = pl.pallas_call(
        _scale_kernel,
        out_shape=jax.ShapeDtypeStruct((B, C, L), x.dtype),
        grid_spec=pltpu.PrefetchScalarGridSpec(
            num_scalar_prefetch=0,
            grid=(B, n_l),
            in_specs=[
                pl.BlockSpec((1, C, tl), lambda b, l: (b, 0, l)),
                pl.BlockSpec((1, C, 1), lambda b, l: (b, 0, 0)),
            ],
            out_specs=pl.BlockSpec((1, C, tl), lambda b, l: (b, 0, l)),
        ),
        compiler_params=pltpu.CompilerParams(
            dimension_semantics=("parallel", "parallel")),
    )(x3, scale)

    return out3.reshape(B, C, H, W)


if __name__ == "__main__":
    # Small shapes consistent with the module: num_feat=32, squeeze_factor=4.
    B, C, H, W = 2, 32, 16, 16
    squeeze_factor = 4
    Cmid = C // squeeze_factor

    key = jax.random.PRNGKey(0)
    kx, k1, k2, k3, k4 = jax.random.split(key, 5)
    x = jax.random.normal(kx, (B, C, H, W), dtype=jnp.float32)
    w1 = jax.random.normal(k1, (Cmid, C), dtype=jnp.float32) * 0.1
    b1 = jax.random.normal(k2, (Cmid,), dtype=jnp.float32) * 0.1
    w2 = jax.random.normal(k3, (C, Cmid), dtype=jnp.float32) * 0.1
    b2 = jax.random.normal(k4, (C,), dtype=jnp.float32) * 0.1

    out = channel_attention(x, w1, b1, w2, b2)
    out = jax.block_until_ready(out)

    # Pure-JAX reference (same math as the PyTorch ChannelAttention forward).
    pooled = jnp.mean(x, axis=(2, 3))                       # (B, C)
    h_ref = jnp.maximum(pooled @ w1.T + b1, 0.0)            # (B, Cmid)
    s_ref = jax.nn.sigmoid(h_ref @ w2.T + b2)               # (B, C)
    ref = x * s_ref[:, :, None, None]

    assert out.shape == x.shape and out.dtype == x.dtype
    assert jnp.allclose(out, ref, atol=1e-4, rtol=1e-4), "mismatch vs reference"
    print("KERNEL_OK")
</pallas_src>

<mosaic_0001>
module attributes {stable_mosaic.version = 11 : i64} {
  func.func @_pool_mlp_kernel(%arg0: i32, %arg1: i32, %arg2: memref<1x32x256xf32, #tpu.memory_space<vmem>>, %arg3: memref<32x8xf32, #tpu.memory_space<vmem>>, %arg4: memref<1x8xf32, #tpu.memory_space<vmem>>, %arg5: memref<8x32xf32, #tpu.memory_space<vmem>>, %arg6: memref<1x32xf32, #tpu.memory_space<vmem>>, %arg7: memref<1x1x32xf32, #tpu.memory_space<vmem>>, %arg8: memref<1x32xf32, #tpu.memory_space<vmem>>) attributes {dimension_semantics = [#tpu.dimension_semantics<parallel>, #tpu.dimension_semantics<arbitrary>], iteration_bounds = array<i64: 2, 1>, scalar_prefetch = 0 : i64, scratch_operands = 1 : i64, tpu.core_type = #tpu.core_type<tc>, window_params = [{transform_indices = @transform_0, window_bounds = array<i64: 1, 32, 256>}, {pipeline_mode = #tpu.pipeline_mode<synchronous>, transform_indices = @transform_1, window_bounds = array<i64: 32, 8>}, {pipeline_mode = #tpu.pipeline_mode<synchronous>, transform_indices = @transform_2, window_bounds = array<i64: 1, 8>}, {pipeline_mode = #tpu.pipeline_mode<synchronous>, transform_indices = @transform_3, window_bounds = array<i64: 8, 32>}, {pipeline_mode = #tpu.pipeline_mode<synchronous>, transform_indices = @transform_4, window_bounds = array<i64: 1, 32>}, {transform_indices = @transform_5, window_bounds = array<i64: 1, 1, 32>}]} {
    %c0_i32 = arith.constant 0 : i32
    %0 = arith.cmpi eq, %arg1, %c0_i32 : i32
    %1 = arith.extui %0 : i1 to i32
    %c0_i32_0 = arith.constant 0 : i32
    %2 = arith.cmpi ne, %1, %c0_i32_0 : i32
    scf.if %2 {
      %cst_9 = arith.constant 0.000000e+00 : f32
      %11 = vector.broadcast %cst_9 : f32 to vector<1x32xf32>
      %c0_10 = arith.constant 0 : index
      %c0_11 = arith.constant 0 : index
      %12 = vector.load %arg8[%c0_10, %c0_11] : memref<1x32xf32, #tpu.memory_space<vmem>>, vector<1x32xf32>
      tpu.vector_store %arg8[%c0_10, %c0_11], %11 {strides = array<i32>} : memref<1x32xf32, #tpu.memory_space<vmem>>, vector<1x32xf32>,
    } else {
    }
    %c0 = arith.constant 0 : index
    %c0_1 = arith.constant 0 : index
    %3 = vector.load %arg8[%c0, %c0_1] : memref<1x32xf32, #tpu.memory_space<vmem>>, vector<1x32xf32>
    %c0_2 = arith.constant 0 : index
    %c0_3 = arith.constant 0 : index
    %c0_4 = arith.constant 0 : index
    %4 = vector.load %arg2[%c0_2, %c0_3, %c0_4] : memref<1x32x256xf32, #tpu.memory_space<vmem>>, vector<1x32x256xf32>
    %cst = arith.constant dense<0.000000e+00> : vector<1x32xf32>
    %5 = vector.multi_reduction <add>, %4, %cst [2] : vector<1x32x256xf32> to vector<1x32xf32>
    %6 = arith.addf %3, %5 : vector<1x32xf32>
    %c0_5 = arith.constant 0 : index
    %c0_6 = arith.constant 0 : index
    %7 = vector.load %arg8[%c0_5, %c0_6] : memref<1x32xf32, #tpu.memory_space<vmem>>, vector<1x32xf32>
    tpu.vector_store %arg8[%c0_5, %c0_6], %6 {strides = array<i32>} : memref<1x32xf32, #tpu.memory_space<vmem>>, vector<1x32xf32>,
    %c0_i32_7 = arith.constant 0 : i32
    %8 = arith.cmpi eq, %arg1, %c0_i32_7 : i32
    %9 = arith.extui %8 : i1 to i32
    %c0_i32_8 = arith.constant 0 : i32
    %10 = arith.cmpi ne, %9, %c0_i32_8 : i32
    scf.if %10 {
      %c0_9 = arith.constant 0 : index
      %c0_10 = arith.constant 0 : index
      %11 = vector.load %arg8[%c0_9, %c0_10] : memref<1x32xf32, #tpu.memory_space<vmem>>, vector<1x32xf32>
      %cst_11 = arith.constant 3.906250e-03 : f32
      %12 = vector.broadcast %cst_11 : f32 to vector<1x32xf32>
      %13 = arith.mulf %11, %12 : vector<1x32xf32>
      %c0_12 = arith.constant 0 : index
      %c0_13 = arith.constant 0 : index
      %14 = vector.load %arg3[%c0_12, %c0_13] : memref<32x8xf32, #tpu.memory_space<vmem>>, vector<32x8xf32>
      %cst_14 = arith.constant dense<0.000000e+00> : vector<1x8xf32>
      %15 = tpu.matmul %13, %14, %cst_14 {dimension_numbers = #tpu.dot_dimension_numbers<[1], [0], [0], [1], [0, 0, 1, 1], [], []>} : vector<1x32xf32>, vector<32x8xf32>, vector<1x8xf32> -> vector<1x8xf32>
      %c0_15 = arith.constant 0 : index
      %c0_16 = arith.constant 0 : index
      %16 = vector.load %arg4[%c0_15, %c0_16] : memref<1x8xf32, #tpu.memory_space<vmem>>, vector<1x8xf32>
      %17 = arith.addf %15, %16 : vector<1x8xf32>
      %cst_17 = arith.constant 0.000000e+00 : f32
      %18 = vector.broadcast %cst_17 : f32 to vector<1x8xf32>
      %19 = arith.maximumf %17, %18 : vector<1x8xf32>
      %c0_18 = arith.constant 0 : index
      %c0_19 = arith.constant 0 : index
      %20 = vector.load %arg5[%c0_18, %c0_19] : memref<8x32xf32, #tpu.memory_space<vmem>>, vector<8x32xf32>
      %cst_20 = arith.constant dense<0.000000e+00> : vector<1x32xf32>
      %21 = tpu.matmul %19, %20, %cst_20 {dimension_numbers = #tpu.dot_dimension_numbers<[1], [0], [0], [1], [0, 0, 1, 1], [], []>} : vector<1x8xf32>, vector<8x32xf32>, vector<1x32xf32> -> vector<1x32xf32>
      %c0_21 = arith.constant 0 : index
      %c0_22 = arith.constant 0 : index
      %22 = vector.load %arg6[%c0_21, %c0_22] : memref<1x32xf32, #tpu.memory_space<vmem>>, vector<1x32xf32>
      %23 = arith.addf %21, %22 : vector<1x32xf32>
      %cst_23 = arith.constant 0.000000e+00 : f32
      %24 = vector.broadcast %cst_23 : f32 to vector<1x32xf32>
      %25 = arith.subf %24, %23 : vector<1x32xf32>
      %26 = math.exp %25 : vector<1x32xf32>
      %cst_24 = arith.constant 1.000000e+00 : f32
      %27 = vector.broadcast %cst_24 : f32 to vector<1x32xf32>
      %28 = arith.addf %27, %26 : vector<1x32xf32>
      %cst_25 = arith.constant 1.000000e+00 : f32
      %29 = vector.broadcast %cst_25 : f32 to vector<1x32xf32>
      %30 = arith.divf %29, %28 : vector<1x32xf32>
      %31 = vector.shape_cast %30 : vector<1x32xf32> to vector<1x1x32xf32>
      %c0_26 = arith.constant 0 : index
      %c0_27 = arith.constant 0 : index
      %c0_28 = arith.constant 0 : index
      %32 = vector.load %arg7[%c0_26, %c0_27, %c0_28] : memref<1x1x32xf32, #tpu.memory_space<vmem>>, vector<1x1x32xf32>
      tpu.vector_store %arg7[%c0_26, %c0_27, %c0_28], %31 {strides = array<i32>} : memref<1x1x32xf32, #tpu.memory_space<vmem>>, vector<1x1x32xf32>,
    } else {
    }
    return
  }
  func.func @transform_0(%arg0: i32, %arg1: i32) -> (i32, i32, i32) {
    %c0_i32 = arith.constant 0 : i32
    %c0_i32_0 = arith.constant 0 : i32
    return %arg0, %c0_i32, %arg1 : i32, i32, i32
  }
  func.func @transform_1(%arg0: i32, %arg1: i32) -> (i32, i32) {
    %c0_i32 = arith.constant 0 : i32
    %c0_i32_0 = arith.constant 0 : i32
    %c0_i32_1 = arith.constant 0 : i32
    return %c0_i32, %c0_i32_0 : i32, i32
  }
  func.func @transform_2(%arg0: i32, %arg1: i32) -> (i32, i32) {
    %c0_i32 = arith.constant 0 : i32
    %c0_i32_0 = arith.constant 0 : i32
    %c0_i32_1 = arith.constant 0 : i32
    return %c0_i32, %c0_i32_0 : i32, i32
  }
  func.func @transform_3(%arg0: i32, %arg1: i32) -> (i32, i32) {
    %c0_i32 = arith.constant 0 : i32
    %c0_i32_0 = arith.constant 0 : i32
    %c0_i32_1 = arith.constant 0 : i32
    return %c0_i32, %c0_i32_0 : i32, i32
  }
  func.func @transform_4(%arg0: i32, %arg1: i32) -> (i32, i32) {
    %c0_i32 = arith.constant 0 : i32
    %c0_i32_0 = arith.constant 0 : i32
    %c0_i32_1 = arith.constant 0 : i32
    return %c0_i32, %c0_i32_0 : i32, i32
  }
  func.func @transform_5(%arg0: i32, %arg1: i32) -> (i32, i32, i32) {
    %c0_i32 = arith.constant 0 : i32
    %c0_i32_0 = arith.constant 0 : i32
    %c0_i32_1 = arith.constant 0 : i32
    return %arg0, %c0_i32, %c0_i32_0 : i32, i32, i32
  }
}

</mosaic_0001>

<llo_original>
// kernel: tpu_custom_call.1
$region0: #{tpu_custom_call.1}
  #allocation0 [shape = 'u32[]', space=smem, size = 0x4, offset = 0x4, fixed_abs, tag = 'smem constant byte address 0x4 - core index']
  #allocation1 [shape = 'u32[144,128]{1,0:T(1,128)}', space=vmem, size = 0x12000, scoped, tag = 'internal scratch']
  #allocation2 [shape = 'f32[1,32]{1,0:T(1,128)}', space=vmem, size = 0x200, scoped, tag = 'scratch operand']
  %s0 = inlined_call_operand.hbm [shape: f32[2,32,256], index: 0, kind: input, shape index: {}]
  %s1 = inlined_call_operand.vmem [shape: f32[32,8], index: 1, kind: input, shape index: {}]
  %s2 = inlined_call_operand.vmem [shape: f32[1,8], index: 2, kind: input, shape index: {}]
  %s3 = inlined_call_operand.vmem [shape: f32[8,32], index: 3, kind: input, shape index: {}]
  %s4 = inlined_call_operand.vmem [shape: f32[1,32], index: 4, kind: input, shape index: {}]
  %s5 = inlined_call_operand.hbm [shape: f32[2,1,32], index: 5, kind: output, shape index: {}]
  %s6 = sld [smem:[#allocation0]]
  $region65: #{tpu_custom_call.1} parent=0
    _
  %s8 = ssub.s32 1, %s6
  %s9 = scalar_select 0, %s8, %s6
  $region1: #{tpu_custom_call.1} parent=0
    #allocation3 [shape = 'u8[65536]{0}', space=vmem, size = 0x10000, scoped, tag = 'input window, operand 0']
    #allocation4 [shape = 's32[2]{0}', space=sflag, size = 0x8, scoped, tag = 'scoped memory for tpu_custom_call.1']
    #allocation5 [shape = 's32[2]{0}', space=sflag, size = 0x8, scoped, tag = 'scoped memory for tpu_custom_call.1']
    #allocation6 [shape = 'u8[1024]{0}', space=vmem, size = 0x400, scoped, tag = 'output window, operand 0']
    %10 = vsyncpa [#allocation4], 0
    %s11 = scalar_lea.sflag [#allocation4], 1
    %12 = vsyncpa %s11, 0
    %13 = vsyncpa [#allocation5], 0
    %s14 = scalar_lea.sflag [#allocation5], 1
    %15 = vsyncpa %s14, 0
    loop: start=0, step=1, limit=4
    $region2: #{tpu_custom_call.1} parent=1 // loop_pre_header
      _
    $region3: #{tpu_custom_call.1} parent=1 // loop_header
      %s17 = sphi 0, %s21
      %p18 = scmp.ge.s32.totalorder %s17, 4
      %s24 = sphi 0, %s36
      %s25 = sphi 0, %s32
      %s26 = sphi 0, %s24
      %s27 = sphi 0, %s25
      %s28 = sphi 0, %s26
      %s29 = sphi 0, %s27
      %s41 = sphi 0, %s43
      %s44 = sphi 0, %s41
      %s45 = sphi 0, %s44
      %s61 = sphi 0, %s45
      %s65 = sphi 0, %s65
      %s67 = sphi 0, %s65
      %s68 = sphi 0, %s67
      %s82 = sphi 0, %s68
      %s86 = sphi 0, %s86
      %s88 = sphi 0, %s86
      %s89 = sphi 0, %s88
      %s103 = sphi 0, %s89
      %s107 = sphi 0, %s107
      %s109 = sphi 0, %s107
      %s110 = sphi 0, %s109
      %s124 = sphi 0, %s110
      %s128 = sphi 0, %s128
      %s130 = sphi 0, %s128
      %s131 = sphi 0, %s130
      %s145 = sphi 0, %s131
      %s151 = sphi 0, %s153
      %s154 = sphi 0, %s151
      %s155 = sphi 0, %s154
      %s171 = sphi 0, %s155
    $region4: #{tpu_custom_call.1} parent=1 // loop_header_branch
      %20 = sbr.rel (%p18) target = $region8
    $region5: #{tpu_custom_call.1} parent=1 // loop_body
      %s22 = ssub.s32 %s17, 1
      %s23 = ssub.s32 %s17, 2
      %s30 = sadd.s32 1, %s25
      %p31 = scmp.ge.s32.totalorder %s30, 1
      %s32 = scalar_select %p31, 0, %s30
      %s33 = sadd.s32 1, %s24
      %s34 = scalar_select %p31, %s33, %s24
      %p35 = scmp.ge.s32.totalorder %s34, 2
      %s36 = scalar_select %p35, 0, %s34
      %s37 = ssub.s32 %s24, %s36
      %s38 = ssub.s32 %s25, %s32
      %s39 = sor.u32 %s37, %s38
      %p40 = scmp.eq.s32.totalorder %s39, 0
      %s42 = sadd.s32 %s41, 1
      %s43 = scalar_select %p40, %s41, %s42
      %p46 = pneg %p40
      %p47 = scmp.eq.s32.totalorder %s17, 1
      %p48 = por %p46, %p47
      %p49 = scmp.ne.s32.totalorder %s41, %s44
      %p50 = scmp.eq.s32.totalorder %s17, 0
      %p51 = por %p49, %p50
      %p52 = scmp.ne.s32.totalorder %s41, %s44
      %p53 = scmp.eq.s32.totalorder %s22, 1
      %p54 = por %p52, %p53
      %p55 = scmp.ne.s32.totalorder %s44, %s45
      %p56 = scmp.eq.s32.totalorder %s22, 0
      %p57 = por %p55, %p56
      %p58 = scmp.ne.s32.totalorder %s44, %s45
      %p59 = scmp.eq.s32.totalorder %s23, 1
      %p60 = por %p58, %p59
      %p62 = scmp.ne.s32.totalorder %s45, %s61
      %p63 = scmp.eq.s32.totalorder %s23, 0
      %p64 = por %p62, %p63
      %s66 = sadd.s32 %s65, 1
      %p69 = scmp.eq.s32.totalorder %s17, 1
      %p70 = scmp.ne.s32.totalorder %s65, %s67
      %p71 = scmp.eq.s32.totalorder %s17, 0
      %p72 = por %p70, %p71
      %p73 = scmp.ne.s32.totalorder %s65, %s67
      %p74 = scmp.eq.s32.totalorder %s22, 1
      %p75 = por %p73, %p74
      %p76 = scmp.ne.s32.totalorder %s67, %s68
      %p77 = scmp.eq.s32.totalorder %s22, 0
      %p78 = por %p76, %p77
      %p79 = scmp.ne.s32.totalorder %s67, %s68
      %p80 = scmp.eq.s32.totalorder %s23, 1
      %p81 = por %p79, %p80
      %p83 = scmp.ne.s32.totalorder %s68, %s82
      %p84 = scmp.eq.s32.totalorder %s23, 0
      %p85 = por %p83, %p84
      %s87 = sadd.s32 %s86, 1
      %p90 = scmp.eq.s32.totalorder %s17, 1
      %p91 = scmp.ne.s32.totalorder %s86, %s88
      %p92 = scmp.eq.s32.totalorder %s17, 0
      %p93 = por %p91, %p92
      %p94 = scmp.ne.s32.totalorder %s86, %s88
      %p95 = scmp.eq.s32.totalorder %s22, 1
      %p96 = por %p94, %p95
      %p97 = scmp.ne.s32.totalorder %s88, %s89
      %p98 = scmp.eq.s32.totalorder %s22, 0
      %p99 = por %p97, %p98
      %p100 = scmp.ne.s32.totalorder %s88, %s89
      %p101 = scmp.eq.s32.totalorder %s23, 1
      %p102 = por %p100, %p101
      %p104 = scmp.ne.s32.totalorder %s89, %s103
      %p105 = scmp.eq.s32.totalorder %s23, 0
      %p106 = por %p104, %p105
      %s108 = sadd.s32 %s107, 1
      %p111 = scmp.eq.s32.totalorder %s17, 1
      %p112 = scmp.ne.s32.totalorder %s107, %s109
      %p113 = scmp.eq.s32.totalorder %s17, 0
      %p114 = por %p112, %p113
      %p115 = scmp.ne.s32.totalorder %s107, %s109
      %p116 = scmp.eq.s32.totalorder %s22, 1
      %p117 = por %p115, %p116
      %p118 = scmp.ne.s32.totalorder %s109, %s110
      %p119 = scmp.eq.s32.totalorder %s22, 0
      %p120 = por %p118, %p119
      %p121 = scmp.ne.s32.totalorder %s109, %s110
      %p122 = scmp.eq.s32.totalorder %s23, 1
      %p123 = por %p121, %p122
      %p125 = scmp.ne.s32.totalorder %s110, %s124
      %p126 = scmp.eq.s32.totalorder %s23, 0
      %p127 = por %p125, %p126
      %s129 = sadd.s32 %s128, 1
      %p132 = scmp.eq.s32.totalorder %s17, 1
      %p133 = scmp.ne.s32.totalorder %s128, %s130
      %p134 = scmp.eq.s32.totalorder %s17, 0
      %p135 = por %p133, %p134
      %p136 = scmp.ne.s32.totalorder %s128, %s130
      %p137 = scmp.eq.s32.totalorder %s22, 1
      %p138 = por %p136, %p137
      %p139 = scmp.ne.s32.totalorder %s130, %s131
      %p140 = scmp.eq.s32.totalorder %s22, 0
      %p141 = por %p139, %p140
      %p142 = scmp.ne.s32.totalorder %s130, %s131
      %p143 = scmp.eq.s32.totalorder %s23, 1
      %p144 = por %p142, %p143
      %p146 = scmp.ne.s32.totalorder %s131, %s145
      %p147 = scmp.eq.s32.totalorder %s23, 0
      %p148 = por %p146, %p147
      %s149 = ssub.s32 %s24, %s36
      %p150 = scmp.eq.s32.totalorder %s149, 0
      %s152 = sadd.s32 %s151, 1
      %s153 = scalar_select %p150, %s151, %s152
      %p156 = pneg %p150
      %p157 = scmp.eq.s32.totalorder %s17, 1
      %p158 = por %p156, %p157
      %p159 = scmp.ne.s32.totalorder %s151, %s154
      %p160 = scmp.eq.s32.totalorder %s17, 0
      %p161 = por %p159, %p160
      %p162 = scmp.ne.s32.totalorder %s151, %s154
      %p163 = scmp.eq.s32.totalorder %s22, 1
      %p164 = por %p162, %p163
      %p165 = scmp.ne.s32.totalorder %s154, %s155
      %p166 = scmp.eq.s32.totalorder %s22, 0
      %p167 = por %p165, %p166
      %p168 = scmp.ne.s32.totalorder %s154, %s155
      %p169 = scmp.eq.s32.totalorder %s23, 1
      %p170 = por %p168, %p169
      %p172 = scmp.ne.s32.totalorder %s155, %s171
      %p173 = scmp.eq.s32.totalorder %s23, 0
      %p174 = por %p172, %p173
      %p175 = scmp.le.s32.totalorder 1, %s17
      %p176 = scmp.lt.s32.totalorder %s17, 3
      %p177 = pnand %p175, %p176
      %p178 = pneg %p177
      // Predicated region
      $region9: #{tpu_custom_call.1} parent=5 // pred_check
        _
      $region10: #{tpu_custom_call.1} parent=5 // pred_check_branch
        %180 = sbr.rel (%p177) target = $region12
      $region11: #{tpu_custom_call.1} parent=5 // pred_region
        %s181 = ssub.s32 %s17, 1
        // Predicated region
        $region13: #{tpu_custom_call.1} parent=11 // pred_check
          %p182 = pneg %p78
        $region14: #{tpu_custom_call.1} parent=11 // pred_check_branch
          %184 = sbr.rel (%p182) target = $region16
        $region15: #{tpu_custom_call.1} parent=11 // pred_region
          _
        $region16: #{tpu_custom_call.1} parent=11 // pred_fallthru
          _
        // Predicated region
        $region17: #{tpu_custom_call.1} parent=11 // pred_check
          %p185 = pneg %p99
        $region18: #{tpu_custom_call.1} parent=11 // pred_check_branch
          %187 = sbr.rel (%p185) target = $region20
        $region19: #{tpu_custom_call.1} parent=11 // pred_region
          _
        $region20: #{tpu_custom_call.1} parent=11 // pred_fallthru
          _
        // Predicated region
        $region21: #{tpu_custom_call.1} parent=11 // pred_check
          %p188 = pneg %p120
        $region22: #{tpu_custom_call.1} parent=11 // pred_check_branch
          %190 = sbr.rel (%p188) target = $region24
        $region23: #{tpu_custom_call.1} parent=11 // pred_region
          _
        $region24: #{tpu_custom_call.1} parent=11 // pred_fallthru
          _
        // Predicated region
        $region25: #{tpu_custom_call.1} parent=11 // pred_check
          %p191 = pneg %p141
        $region26: #{tpu_custom_call.1} parent=11 // pred_check_branch
          %193 = sbr.rel (%p191) target = $region28
        $region27: #{tpu_custom_call.1} parent=11 // pred_region
          _
        $region28: #{tpu_custom_call.1} parent=11 // pred_fallthru
          _
      $region12: #{tpu_custom_call.1} parent=5 // pred_fallthru
        _
      %p194 = scmp.lt.s32.totalorder %s17, 2
      // Predicated region
      $region29: #{tpu_custom_call.1} parent=5 // pred_check
        %p195 = pneg %p194
      $region30: #{tpu_custom_call.1} parent=5 // pred_check_branch
        %197 = sbr.rel (%p195) target = $region32
      $region31: #{tpu_custom_call.1} parent=5 // pred_region
        // Predicated region
        $region33: #{tpu_custom_call.1} parent=31 // pred_check
          %p198 = pneg %p51
        $region34: #{tpu_custom_call.1} parent=31 // pred_check_branch
          %200 = sbr.rel (%p198) target = $region36
        $region35: #{tpu_custom_call.1} parent=31 // pred_region
          %s201 = sand.u32 %s41, 1
          %s202 = scalar_lea.sflag [#allocation4], %s201
          %s203 = sand.u32 %s41, 1
          %s204 = smul.addr %s203, 64
          %s205 = scalar_lea.vmem [#allocation3], %s204
          %s206 = smul.u32 2, %s25
          %s208 = ssub.s32 1024, 1024
          %209 = vsyncadd %s202, %s208
          %s210 = smul.addr %s24, 8
          %s211 = sadd.s32 %s206, %s210
          %s212 = smul.addr %s211, 128
          %s213 = scalar_lea.hbm %s0, %s212
          %s214 = sshll.u32 %s205, 4
          %s215 = int_to_ptr.vmem [resolvable:$true] %s214
          %220 = dma.hbm_to_vmem [thread:$0]  %s213, 1024, %s215, %s202, 256, 256, 16
        $region36: #{tpu_custom_call.1} parent=31 // pred_fallthru
          _
      $region32: #{tpu_custom_call.1} parent=5 // pred_fallthru
        _
      %p221 = scmp.le.s32.totalorder 1, %s17
      %p222 = scmp.lt.s32.totalorder %s17, 3
      %p223 = pnand %p221, %p222
      %p224 = pneg %p223
      // Predicated region
      $region37: #{tpu_custom_call.1} parent=5 // pred_check
        _
      $region38: #{tpu_custom_call.1} parent=5 // pred_check_branch
        %226 = sbr.rel (%p223) target = $region40
      $region39: #{tpu_custom_call.1} parent=5 // pred_region
        %s227 = ssub.s32 %s17, 1
        %s228 = sand.u32 %s44, 1
        %s229 = scalar_lea.sflag [#allocation4], %s228
        %s230 = sand.u32 %s44, 1
        %s231 = smul.addr %s230, 64
        %s232 = scalar_lea.vmem [#allocation3], %s231
        // Predicated region
        $region41: #{tpu_custom_call.1} parent=39 // pred_check
          %p233 = pneg %p57
        $region42: #{tpu_custom_call.1} parent=39 // pred_check_branch
          %235 = sbr.rel (%p233) target = $region44
        $region43: #{tpu_custom_call.1} parent=39 // pred_region
          %236 = dma.done %s229, 1024
        $region44: #{tpu_custom_call.1} parent=39 // pred_fallthru
          _
        %s237 = sand.u32 %s44, 1
        %s238 = scalar_lea.sflag [#allocation4], %s237
        %s239 = sand.u32 %s44, 1
        %s240 = smul.addr %s239, 64
        %s241 = scalar_lea.vmem [#allocation3], %s240
        %p242 = pneg %p57
        %p243 = pneg %p54
        %p244 = pneg %p78
        %p245 = pneg %p75
        %p246 = pneg %p99
        %p247 = pneg %p96
        %p248 = pneg %p120
        %p249 = pneg %p117
        %p250 = pneg %p141
        %p251 = pneg %p138
        %p252 = pneg %p167
        %p253 = pneg %p164
        %s254 = sand.u32 %s154, 1
        %s255 = scalar_lea.sflag [#allocation5], %s254
        %s256 = sand.u32 %s154, 1
        %s257 = scalar_lea.vmem [#allocation6], %s256
        %s258 = smul.u32 2, %s27
        %p259 = scmp.eq.s32.totalorder %s27, 0
        // Predicated region
        $region45: #{tpu_custom_call.1} parent=39 // pred_check
          %p260 = pneg %p259
        $region46: #{tpu_custom_call.1} parent=39 // pred_check_branch
          %262 = sbr.rel (%p260) target = $region48
        $region47: #{tpu_custom_call.1} parent=39 // pred_region
          %vm263 = vcmask 253952
          %264 = vst.msk [vmem:[#allocation2] sm:$0x1] %vm263, 0.0
        $region48: #{tpu_custom_call.1} parent=39 // pred_fallthru
          _
        %v265 = vld [vmem:[#allocation2] sm:$0x1]
        %v266 = vld [vmem:[%s232] sm:$0xff]
        %v267 = vld [vmem:[%s232 + $0x8] sm:$0xff]
        %v268 = vld [vmem:[%s232 + $0x10] sm:$0xff]
        %v269 = vld [vmem:[%s232 + $0x18] sm:$0xff]
        %v270 = vld [vmem:[%s232 + $0x20] sm:$0xff]
        %v271 = vld [vmem:[%s232 + $0x28] sm:$0xff]
        %v272 = vld [vmem:[%s232 + $0x30] sm:$0xff]
        %v273 = vld [vmem:[%s232 + $0x38] sm:$0xff]
        %v274 = vadd.f32 %v266, %v267
        %275 = vadd.xlane.f32.xlu0 %v274
        %v276 = vpop.xlane.xlu0 %275
        %v277 = vadd.f32 %v268, %v269
        %278 = vadd.xlane.f32.xlu0 %v277
        %v279 = vpop.xlane.xlu0 %278
        %v280 = vadd.f32 %v270, %v271
        %281 = vadd.xlane.f32.xlu0 %v280
        %v282 = vpop.xlane.xlu0 %281
        %v283 = vadd.f32 %v272, %v273
        %284 = vadd.xlane.f32.xlu0 %v283
        %v285 = vpop.xlane.xlu0 %284
        %v290 = vlaneseq
        %v291 = vshrl.u32 %v290, 7
        %v292 = vsub.s32 0, %v291
        %v293 = vrot.slane %v276, %v292
        %v294 = vlaneseq
        %v295 = vshrl.u32 %v294, 7
        %v296 = vsub.s32 1, %v295
        %v297 = vrot.slane %v276, %v296
        %v298 = vlaneseq
        %v299 = vshrl.u32 %v298, 7
        %v300 = vsub.s32 2, %v299
        %v301 = vrot.slane %v276, %v300
        %v302 = vlaneseq
        %v303 = vshrl.u32 %v302, 7
        %v304 = vsub.s32 3, %v303
        %v305 = vrot.slane %v276, %v304
        %v306 = vlaneseq
        %v307 = vshrl.u32 %v306, 7
        %v308 = vsub.s32 4, %v307
        %v309 = vrot.slane %v276, %v308
        %v310 = vlaneseq
        %v311 = vshrl.u32 %v310, 7
        %v312 = vsub.s32 5, %v311
        %v313 = vrot.slane %v276, %v312
        %v314 = vlaneseq
        %v315 = vshrl.u32 %v314, 7
        %v316 = vsub.s32 6, %v315
        %v317 = vrot.slane %v276, %v316
        %v318 = vlaneseq
        %v319 = vshrl.u32 %v318, 7
        %v320 = vsub.s32 7, %v319
        %v321 = vrot.slane %v276, %v320
        %v322 = vlaneseq
        %v323 = vshrl.u32 %v322, 7
        %v324 = vsub.s32 0, %v323
        %v325 = vrot.slane %v279, %v324
        %v326 = vlaneseq
        %v327 = vshrl.u32 %v326, 7
        %v328 = vsub.s32 1, %v327
        %v329 = vrot.slane %v279, %v328
        %v330 = vlaneseq
        %v331 = vshrl.u32 %v330, 7
        %v332 = vsub.s32 2, %v331
        %v333 = vrot.slane %v279, %v332
        %v334 = vlaneseq
        %v335 = vshrl.u32 %v334, 7
        %v336 = vsub.s32 3, %v335
        %v337 = vrot.slane %v279, %v336
        %v338 = vlaneseq
        %v339 = vshrl.u32 %v338, 7
        %v340 = vsub.s32 4, %v339
        %v341 = vrot.slane %v279, %v340
        %v342 = vlaneseq
        %v343 = vshrl.u32 %v342, 7
        %v344 = vsub.s32 5, %v343
        %v345 = vrot.slane %v279, %v344
        %v346 = vlaneseq
        %v347 = vshrl.u32 %v346, 7
        %v348 = vsub.s32 6, %v347
        %v349 = vrot.slane %v279, %v348
        %v350 = vlaneseq
        %v351 = vshrl.u32 %v350, 7
        %v352 = vsub.s32 7, %v351
        %v353 = vrot.slane %v279, %v352
        %v354 = vlaneseq
        %v355 = vshrl.u32 %v354, 7
        %v356 = vsub.s32 0, %v355
        %v357 = vrot.slane %v282, %v356
        %v358 = vlaneseq
        %v359 = vshrl.u32 %v358, 7
        %v360 = vsub.s32 1, %v359
        %v361 = vrot.slane %v282, %v360
        %v362 = vlaneseq
        %v363 = vshrl.u32 %v362, 7
        %v364 = vsub.s32 2, %v363
        %v365 = vrot.slane %v282, %v364
        %v366 = vlaneseq
        %v367 = vshrl.u32 %v366, 7
        %v368 = vsub.s32 3, %v367
        %v369 = vrot.slane %v282, %v368
        %v370 = vlaneseq
        %v371 = vshrl.u32 %v370, 7
        %v372 = vsub.s32 4, %v371
        %v373 = vrot.slane %v282, %v372
        %v374 = vlaneseq
        %v375 = vshrl.u32 %v374, 7
        %v376 = vsub.s32 5, %v375
        %v377 = vrot.slane %v282, %v376
        %v378 = vlaneseq
        %v379 = vshrl.u32 %v378, 7
        %v380 = vsub.s32 6, %v379
        %v381 = vrot.slane %v282, %v380
        %v382 = vlaneseq
        %v383 = vshrl.u32 %v382, 7
        %v384 = vsub.s32 7, %v383
        %v385 = vrot.slane %v282, %v384
        %v386 = vlaneseq
        %v387 = vshrl.u32 %v386, 7
        %v388 = vsub.s32 0, %v387
        %v389 = vrot.slane %v285, %v388
        %v390 = vlaneseq
        %v391 = vshrl.u32 %v390, 7
        %v392 = vsub.s32 1, %v391
        %v393 = vrot.slane %v285, %v392
        %v394 = vlaneseq
        %v395 = vshrl.u32 %v394, 7
        %v396 = vsub.s32 2, %v395
        %v397 = vrot.slane %v285, %v396
        %v398 = vlaneseq
        %v399 = vshrl.u32 %v398, 7
        %v400 = vsub.s32 3, %v399
        %v401 = vrot.slane %v285, %v400
        %v402 = vlaneseq
        %v403 = vshrl.u32 %v402, 7
        %v404 = vsub.s32 4, %v403
        %v405 = vrot.slane %v285, %v404
        %v406 = vlaneseq
        %v407 = vshrl.u32 %v406, 7
        %v408 = vsub.s32 5, %v407
        %v409 = vrot.slane %v285, %v408
        %v410 = vlaneseq
        %v411 = vshrl.u32 %v410, 7
        %v412 = vsub.s32 6, %v411
        %v413 = vrot.slane %v285, %v412
        %v414 = vlaneseq
        %v415 = vshrl.u32 %v414, 7
        %v416 = vsub.s32 7, %v415
        %v417 = vrot.slane %v285, %v416
        %v418 = vcombine.low %v293, %v297
        %v419 = vcombine.low %v301, %v305
        %v420 = vcombine.low %v309, %v313
        %v421 = vcombine.low %v317, %v321
        %v423 = vunpack.c.l.s4 1966171168
        %v424 = vunpack.c.0.s8 %v423
        %v425 = vlaneseq
        %v426 = vshrl.u32 %v425, 7
        %v427 = vsub.s32 %v424, %v426
        %v428 = vrot.slane %v418, %v427
        %v430 = vunpack.c.l.s4 1966171168
        %v431 = vunpack.c.0.s8 %v430
        %v432 = vlaneseq
        %v433 = vshrl.u32 %v432, 7
        %v434 = vsub.s32 %v431, %v433
        %v435 = vrot.slane %v419, %v434
        %v437 = vunpack.c.l.s4 1966171168
        %v438 = vunpack.c.0.s8 %v437
        %v439 = vlaneseq
        %v440 = vshrl.u32 %v439, 7
        %v441 = vsub.s32 %v438, %v440
        %v442 = vrot.slane %v420, %v441
        %v444 = vunpack.c.l.s4 1966171168
        %v445 = vunpack.c.0.s8 %v444
        %v446 = vlaneseq
        %v447 = vshrl.u32 %v446, 7
        %v448 = vsub.s32 %v445, %v447
        %v449 = vrot.slane %v421, %v448
        %v450 = vcombine.low %v428, %v435
        %v451 = vcombine.low %v442, %v449
        %v453 = vunpack.c.l.s4 1966171168
        %v454 = vunpack.c.0.s8 %v453
        %v455 = vlaneseq
        %v456 = vshrl.u32 %v455, 7
        %v457 = vsub.s32 %v454, %v456
        %v458 = vrot.slane %v450, %v457
        %v460 = vunpack.c.l.s4 1966171168
        %v461 = vunpack.c.0.s8 %v460
        %v462 = vlaneseq
        %v463 = vshrl.u32 %v462, 7
        %v464 = vsub.s32 %v461, %v463
        %v465 = vrot.slane %v451, %v464
        %v466 = vcombine.low %v458, %v465
        %v467 = vcombine.low %v325, %v329
        %v468 = vcombine.low %v333, %v337
        %v469 = vcombine.low %v341, %v345
        %v470 = vcombine.low %v349, %v353
        %v472 = vunpack.c.l.s4 1966171168
        %v473 = vunpack.c.0.s8 %v472
        %v474 = vlaneseq
        %v475 = vshrl.u32 %v474, 7
        %v476 = vsub.s32 %v473, %v475
        %v477 = vrot.slane %v467, %v476
        %v479 = vunpack.c.l.s4 1966171168
        %v480 = vunpack.c.0.s8 %v479
        %v481 = vlaneseq
        %v482 = vshrl.u32 %v481, 7
        %v483 = vsub.s32 %v480, %v482
        %v484 = vrot.slane %v468, %v483
        %v486 = vunpack.c.l.s4 1966171168
        %v487 = vunpack.c.0.s8 %v486
        %v488 = vlaneseq
        %v489 = vshrl.u32 %v488, 7
        %v490 = vsub.s32 %v487, %v489
        %v491 = vrot.slane %v469, %v490
        %v493 = vunpack.c.l.s4 1966171168
        %v494 = vunpack.c.0.s8 %v493
        %v495 = vlaneseq
        %v496 = vshrl.u32 %v495, 7
        %v497 = vsub.s32 %v494, %v496
        %v498 = vrot.slane %v470, %v497
        %v499 = vcombine.low %v477, %v484
        %v500 = vcombine.low %v491, %v498
        %v502 = vunpack.c.l.s4 1966171168
        %v503 = vunpack.c.0.s8 %v502
        %v504 = vlaneseq
        %v505 = vshrl.u32 %v504, 7
        %v506 = vsub.s32 %v503, %v505
        %v507 = vrot.slane %v499, %v506
        %v509 = vunpack.c.l.s4 1966171168
        %v510 = vunpack.c.0.s8 %v509
        %v511 = vlaneseq
        %v512 = vshrl.u32 %v511, 7
        %v513 = vsub.s32 %v510, %v512
        %v514 = vrot.slane %v500, %v513
        %v515 = vcombine.low %v507, %v514
        %v516 = vcombine.low %v357, %v361
        %v517 = vcombine.low %v365, %v369
        %v518 = vcombine.low %v373, %v377
        %v519 = vcombine.low %v381, %v385
        %v521 = vunpack.c.l.s4 1966171168
        %v522 = vunpack.c.0.s8 %v521
        %v523 = vlaneseq
        %v524 = vshrl.u32 %v523, 7
        %v525 = vsub.s32 %v522, %v524
        %v526 = vrot.slane %v516, %v525
        %v528 = vunpack.c.l.s4 1966171168
        %v529 = vunpack.c.0.s8 %v528
        %v530 = vlaneseq
        %v531 = vshrl.u32 %v530, 7
        %v532 = vsub.s32 %v529, %v531
        %v533 = vrot.slane %v517, %v532
        %v535 = vunpack.c.l.s4 1966171168
        %v536 = vunpack.c.0.s8 %v535
        %v537 = vlaneseq
        %v538 = vshrl.u32 %v537, 7
        %v539 = vsub.s32 %v536, %v538
        %v540 = vrot.slane %v518, %v539
        %v542 = vunpack.c.l.s4 1966171168
        %v543 = vunpack.c.0.s8 %v542
        %v544 = vlaneseq
        %v545 = vshrl.u32 %v544, 7
        %v546 = vsub.s32 %v543, %v545
        %v547 = vrot.slane %v519, %v546
        %v548 = vcombine.low %v526, %v533
        %v549 = vcombine.low %v540, %v547
        %v551 = vunpack.c.l.s4 1966171168
        %v552 = vunpack.c.0.s8 %v551
        %v553 = vlaneseq
        %v554 = vshrl.u32 %v553, 7
        %v555 = vsub.s32 %v552, %v554
        %v556 = vrot.slane %v548, %v555
        %v558 = vunpack.c.l.s4 1966171168
        %v559 = vunpack.c.0.s8 %v558
        %v560 = vlaneseq
        %v561 = vshrl.u32 %v560, 7
        %v562 = vsub.s32 %v559, %v561
        %v563 = vrot.slane %v549, %v562
        %v564 = vcombine.low %v556, %v563
        %v565 = vcombine.low %v389, %v393
        %v566 = vcombine.low %v397, %v401
        %v567 = vcombine.low %v405, %v409
        %v568 = vcombine.low %v413, %v417
        %v570 = vunpack.c.l.s4 1966171168
        %v571 = vunpack.c.0.s8 %v570
        %v572 = vlaneseq
        %v573 = vshrl.u32 %v572, 7
        %v574 = vsub.s32 %v571, %v573
        %v575 = vrot.slane %v565, %v574
        %v577 = vunpack.c.l.s4 1966171168
        %v578 = vunpack.c.0.s8 %v577
        %v579 = vlaneseq
        %v580 = vshrl.u32 %v579, 7
        %v581 = vsub.s32 %v578, %v580
        %v582 = vrot.slane %v566, %v581
        %v584 = vunpack.c.l.s4 1966171168
        %v585 = vunpack.c.0.s8 %v584
        %v586 = vlaneseq
        %v587 = vshrl.u32 %v586, 7
        %v588 = vsub.s32 %v585, %v587
        %v589 = vrot.slane %v567, %v588
        %v591 = vunpack.c.l.s4 1966171168
        %v592 = vunpack.c.0.s8 %v591
        %v593 = vlaneseq
        %v594 = vshrl.u32 %v593, 7
        %v595 = vsub.s32 %v592, %v594
        %v596 = vrot.slane %v568, %v595
        %v597 = vcombine.low %v575, %v582
        %v598 = vcombine.low %v589, %v596
        %v600 = vunpack.c.l.s4 1966171168
        %v601 = vunpack.c.0.s8 %v600
        %v602 = vlaneseq
        %v603 = vshrl.u32 %v602, 7
        %v604 = vsub.s32 %v601, %v603
        %v605 = vrot.slane %v597, %v604
        %v607 = vunpack.c.l.s4 1966171168
        %v608 = vunpack.c.0.s8 %v607
        %v609 = vlaneseq
        %v610 = vshrl.u32 %v609, 7
        %v611 = vsub.s32 %v608, %v610
        %v612 = vrot.slane %v598, %v611
        %v613 = vcombine.low %v605, %v612
        %614 = vset.pattern.permute.xlu0 0
        %615 = vperm.xlu0 %614, %v466
        %v616 = vpop.permute.xlu0 %615
        %617 = vset.pattern.permute.xlu0 0
        %618 = vperm.xlu0 %617, %v515
        %v619 = vpop.permute.xlu0 %618
        %620 = vset.pattern.permute.xlu0 0
        %621 = vperm.xlu0 %620, %v564
        %v622 = vpop.permute.xlu0 %621
        %623 = vset.pattern.permute.xlu0 0
        %624 = vperm.xlu0 %623, %v613
        %v625 = vpop.permute.xlu0 %624
        %v626 = vlaneseq
        %v627 = vand.u32 %v626, 127
        %v628 = vlaneseq
        %v629 = vshrl.u32 %v628, 7
        %v630 = vsub.s32 %v627, %v629
        %v631 = vrot.slane %v616, %v630
        %v632 = vadd.s32 %v627, 4294967288
        %v633 = vlaneseq
        %v634 = vshrl.u32 %v633, 7
        %v635 = vsub.s32 %v632, %v634
        %v636 = vrot.slane %v619, %v635
        %vm637 = vcmask 130112
        %v638 = vsel %vm637, %v636, %v631
        %v639 = vadd.s32 %v627, 4294967280
        %v640 = vlaneseq
        %v641 = vshrl.u32 %v640, 7
        %v642 = vsub.s32 %v639, %v641
        %v643 = vrot.slane %v622, %v642
        %vm644 = vcmask 195712
        %v645 = vsel %vm644, %v643, %v638
        %v646 = vadd.s32 %v627, 4294967272
        %v647 = vlaneseq
        %v648 = vshrl.u32 %v647, 7
        %v649 = vsub.s32 %v646, %v648
        %v650 = vrot.slane %v625, %v649
        %vm651 = vcmask 261312
        %v652 = vsel %vm651, %v650, %v645
        %v654 = vunpack.c.l.s4 1966171168
        %v655 = vunpack.c.0.s8 %v654
        %v656 = vlaneseq
        %v657 = vshrl.u32 %v656, 7
        %v658 = vsub.s32 %v655, %v657
        %v659 = vrot.slane %v652, %v658
        %v661 = vunpack.c.l.s4 1966171168
        %v662 = vunpack.c.0.s8 %v661
        %v663 = vlaneseq
        %v664 = vshrl.u32 %v663, 7
        %v665 = vsub.s32 %v662, %v664
        %v666 = vrot.slane %v659, %v665
        %v668 = vadd.f32 %v265, %v666
        %vm669 = vcmask 253952
        %670 = vst.msk [vmem:[#allocation2] sm:$0x1] %vm669, %v668
        // Predicated region
        $region49: #{tpu_custom_call.1} parent=39 // pred_check
          %p671 = pneg %p259
        $region50: #{tpu_custom_call.1} parent=39 // pred_check_branch
          %673 = sbr.rel (%p671) target = $region52
        $region51: #{tpu_custom_call.1} parent=39 // pred_region
          %v674 = vld [vmem:[#allocation2] sm:$0x1]
          %v675 = vmul.f32 %v674, 0.00390625
          %v676 = vld [vmem:[%s1] sm:$0xff]
          %v677 = vld [vmem:[%s1 + $0x8] sm:$0xff]
          %v678 = vld [vmem:[%s1 + $0x10] sm:$0xff]
          %v679 = vld [vmem:[%s1 + $0x18] sm:$0xff]
          %v680 = vld [vmem:[%s2] sm:$0x1]
          %vm681 = vcmask 261120
          %v683 = vsel %vm681, %v675, 0
          %685 = vmatprep.subr.mxu0 0.0
          %686 = vmatpush1.msra.mxu0 0.0
          %687 = vmatprep.subr.mxu0 0.0
          %688 = vmatpush1.msra.mxu0 0.0
          %689 = vmatprep.subr.mxu0 0.0
          %690 = vmatpush1.msra.mxu0 0.0
          %691 = vmatprep.subr.mxu0 0.0
          %692 = vmatpush1.msra.mxu0 0.0
          %693 = vmatprep.subr.mxu0 0.0
          %694 = vmatpush1.msra.mxu0 0.0
          %695 = vmatprep.subr.mxu0 0.0
          %696 = vmatpush1.msra.mxu0 0.0
          %697 = vmatprep.subr.mxu0 0.0
          %698 = vmatpush1.msra.mxu0 0.0
          %699 = vmatprep.subr.mxu0 0.0
          %700 = vmatpush1.msra.mxu0 0.0
          %701 = vmatprep.subr.mxu0 0.0
          %702 = vmatpush1.msra.mxu0 0.0
          %703 = vmatprep.subr.mxu0 0.0
          %704 = vmatpush1.msra.mxu0 0.0
          %705 = vmatprep.subr.mxu0 0.0
          %706 = vmatpush1.msra.mxu0 0.0
          %707 = vmatprep.subr.mxu0 0.0
          %708 = vmatpush1.msra.mxu0 0.0
          %709 = vmatprep.subr.mxu0 0.0
          %710 = vmatpush1.msra.mxu0 %v679
          %711 = vmatprep.subr.mxu0 0.0
          %712 = vmatpush1.msra.mxu0 %v678
          %713 = vmatprep.subr.mxu0 0.0
          %714 = vmatpush1.msra.mxu0 %v677
          %715 = vmatprep.subr.mxu0 0.0
          %716 = vmatpush1.msra.mxu0 %v676
          %717 = vmatprep.subr.mxu0 0.0
          %718 = vmatpush2.msra.mxu0 0.0
          %719 = vmatprep.subr.mxu0 0.0
          %720 = vmatpush2.msra.mxu0 0.0
          %721 = vmatprep.subr.mxu0 0.0
          %722 = vmatpush2.msra.mxu0 0.0
          %723 = vmatprep.subr.mxu0 0.0
          %724 = vmatpush2.msra.mxu0 0.0
          %725 = vmatprep.subr.mxu0 0.0
          %726 = vmatpush2.msra.mxu0 0.0
          %727 = vmatprep.subr.mxu0 0.0
          %728 = vmatpush2.msra.mxu0 0.0
          %729 = vmatprep.subr.mxu0 0.0
          %730 = vmatpush2.msra.mxu0 0.0
          %731 = vmatprep.subr.mxu0 0.0
          %732 = vmatpush2.msra.mxu0 0.0
          %733 = vmatprep.subr.mxu0 0.0
          %734 = vmatpush2.msra.mxu0 0.0
          %735 = vmatprep.subr.mxu0 0.0
          %736 = vmatpush2.msra.mxu0 0.0
          %737 = vmatprep.subr.mxu0 0.0
          %738 = vmatpush2.msra.mxu0 0.0
          %739 = vmatprep.subr.mxu0 0.0
          %740 = vmatpush2.msra.mxu0 0.0
          %741 = vmatprep.subr.mxu0 0.0
          %742 = vmatpush2.msra.mxu0 0.0
          %743 = vmatprep.subr.mxu0 0.0
          %744 = vmatpush2.msra.mxu0 0.0
          %745 = vmatprep.subr.mxu0 0.0
          %746 = vmatpush2.msra.mxu0 0.0
          %747 = vmatprep.subr.mxu0 0.0
          %748 = vmatpush2.msra.mxu0 0.0
          %749 = vmatprep.mubr.f32.mxu0 0.0
          %750 = vmatmul.mubr.f32.gmra.mxu0 %v683
          %v751 = vpop.f32.mrf.mxu0
          %v752 = vadd.f32 %v680, %v751
          %v753 = vpop.f32.mrf.mxu0
          %754 = vdwg.mxu0
          %v755 = vmax.f32 %v752, 0.0
          %v756 = vld [vmem:[%s3] sm:$0xff]
          %v757 = vld [vmem:[%s4] sm:$0x1]
          %vm758 = vcmask 64512
          %v760 = vsel %vm758, %v755, 0
          %762 = vmatprep.subr.mxu0 0.0
          %763 = vmatpush1.msra.mxu0 0.0
          %764 = vmatprep.subr.mxu0 0.0
          %765 = vmatpush1.msra.mxu0 0.0
          %766 = vmatprep.subr.mxu0 0.0
          %767 = vmatpush1.msra.mxu0 0.0
          %768 = vmatprep.subr.mxu0 0.0
          %769 = vmatpush1.msra.mxu0 0.0
          %770 = vmatprep.subr.mxu0 0.0
          %771 = vmatpush1.msra.mxu0 0.0
          %772 = vmatprep.subr.mxu0 0.0
          %773 = vmatpush1.msra.mxu0 0.0
          %774 = vmatprep.subr.mxu0 0.0
          %775 = vmatpush1.msra.mxu0 0.0
          %776 = vmatprep.subr.mxu0 0.0
          %777 = vmatpush1.msra.mxu0 0.0
          %778 = vmatprep.subr.mxu0 0.0
          %779 = vmatpush1.msra.mxu0 0.0
          %780 = vmatprep.subr.mxu0 0.0
          %781 = vmatpush1.msra.mxu0 0.0
          %782 = vmatprep.subr.mxu0 0.0
          %783 = vmatpush1.msra.mxu0 0.0
          %784 = vmatprep.subr.mxu0 0.0
          %785 = vmatpush1.msra.mxu0 0.0
          %786 = vmatprep.subr.mxu0 0.0
          %787 = vmatpush1.msra.mxu0 0.0
          %788 = vmatprep.subr.mxu0 0.0
          %789 = vmatpush1.msra.mxu0 0.0
          %790 = vmatprep.subr.mxu0 0.0
          %791 = vmatpush1.msra.mxu0 0.0
          %792 = vmatprep.subr.mxu0 0.0
          %793 = vmatpush1.msra.mxu0 %v756
          %794 = vmatprep.subr.mxu0 0.0
          %795 = vmatpush2.msra.mxu0 0.0
          %796 = vmatprep.subr.mxu0 0.0
          %797 = vmatpush2.msra.mxu0 0.0
          %798 = vmatprep.subr.mxu0 0.0
          %799 = vmatpush2.msra.mxu0 0.0
          %800 = vmatprep.subr.mxu0 0.0
          %801 = vmatpush2.msra.mxu0 0.0
          %802 = vmatprep.subr.mxu0 0.0
          %803 = vmatpush2.msra.mxu0 0.0
          %804 = vmatprep.subr.mxu0 0.0
          %805 = vmatpush2.msra.mxu0 0.0
          %806 = vmatprep.subr.mxu0 0.0
          %807 = vmatpush2.msra.mxu0 0.0
          %808 = vmatprep.subr.mxu0 0.0
          %809 = vmatpush2.msra.mxu0 0.0
          %810 = vmatprep.subr.mxu0 0.0
          %811 = vmatpush2.msra.mxu0 0.0
          %812 = vmatprep.subr.mxu0 0.0
          %813 = vmatpush2.msra.mxu0 0.0
          %814 = vmatprep.subr.mxu0 0.0
          %815 = vmatpush2.msra.mxu0 0.0
          %816 = vmatprep.subr.mxu0 0.0
          %817 = vmatpush2.msra.mxu0 0.0
          %818 = vmatprep.subr.mxu0 0.0
          %819 = vmatpush2.msra.mxu0 0.0
          %820 = vmatprep.subr.mxu0 0.0
          %821 = vmatpush2.msra.mxu0 0.0
          %822 = vmatprep.subr.mxu0 0.0
          %823 = vmatpush2.msra.mxu0 0.0
          %824 = vmatprep.subr.mxu0 0.0
          %825 = vmatpush2.msra.mxu0 0.0
          %826 = vmatprep.mubr.f32.mxu0 0.0
          %827 = vmatmul.mubr.f32.gmra.mxu0 %v760
          %v828 = vpop.f32.mrf.mxu0
          %v829 = vadd.f32 %v757, %v828
          %v830 = vpop.f32.mrf.mxu0
          %831 = vdwg.mxu0
          %v832 = vsub.f32 0.0, %v829
          %v833 = vmul.f32 %v832, 1.442695
          %v834 = vpow.pop %v833
          %v835 = vadd.f32 %v834, 1.0
          %v836 = vrcp.pop %v835
          %v837 = vmul.f32 1.0, %v836
          %838 = vst.msk [vmem:[%s257] sm:$0x1] %vm669, %v837
        $region52: #{tpu_custom_call.1} parent=39 // pred_fallthru
          _
        %s839 = sand.u32 %s154, 1
        %s840 = scalar_lea.sflag [#allocation5], %s839
        %s841 = sand.u32 %s154, 1
        %s842 = scalar_lea.vmem [#allocation6], %s841
        // Predicated region
        $region53: #{tpu_custom_call.1} parent=39 // pred_check
          %p843 = pneg %p164
        $region54: #{tpu_custom_call.1} parent=39 // pred_check_branch
          %845 = sbr.rel (%p843) target = $region56
        $region55: #{tpu_custom_call.1} parent=39 // pred_region
          %s847 = ssub.s32 16, 16
          %848 = vsyncadd %s840, %s847
          %s849 = smul.addr %s26, 16
          %s850 = scalar_lea.hbm %s5, %s849
          %s852 = sshll.u32 %s842, 4
          %s853 = int_to_ptr.vmem [resolvable:$true] %s852
          %855 = dma.vmem_to_hbm [thread:$0]  %s853, 16, %s850, %s840
        $region56: #{tpu_custom_call.1} parent=39 // pred_fallthru
          _
      $region40: #{tpu_custom_call.1} parent=5 // pred_fallthru
        _
      %p856 = scmp.le.s32.totalorder 2, %s17
      // Predicated region
      $region57: #{tpu_custom_call.1} parent=5 // pred_check
        %p857 = pneg %p856
      $region58: #{tpu_custom_call.1} parent=5 // pred_check_branch
        %859 = sbr.rel (%p857) target = $region60
      $region59: #{tpu_custom_call.1} parent=5 // pred_region
        %s860 = ssub.s32 %s17, 2
        // Predicated region
        $region61: #{tpu_custom_call.1} parent=59 // pred_check
          %p861 = pneg %p170
        $region62: #{tpu_custom_call.1} parent=59 // pred_check_branch
          %863 = sbr.rel (%p861) target = $region64
        $region63: #{tpu_custom_call.1} parent=59 // pred_region
          %s864 = sand.u32 %s155, 1
          %s865 = scalar_lea.sflag [#allocation5], %s864
          %s866 = sand.u32 %s155, 1
          %s867 = scalar_lea.vmem [#allocation6], %s866
          %868 = dma.done %s865, 16
        $region64: #{tpu_custom_call.1} parent=59 // pred_fallthru
          _
      $region60: #{tpu_custom_call.1} parent=5 // pred_fallthru
        _
    $region6: #{tpu_custom_call.1} parent=1 // loop_footer
      %s21 = sadd.s32 1, %s17
    $region7: #{tpu_custom_call.1} parent=1 // loop_footer_branch
      %16 = sbr.rel target = $region3
    $region8: #{tpu_custom_call.1} parent=1 // loop_exit
      _
    %869 = vsyncpa [#allocation4], 1
    %s870 = scalar_lea.sflag [#allocation4], 1
    %871 = vsyncpa %s870, 1
    %872 = vsyncpa [#allocation5], 1
    %s873 = scalar_lea.sflag [#allocation5], 1
    %874 = vsyncpa %s873, 1

</llo_original>
